<compile_context>
chip_gen: v7x
topology: tpu7x:2x2x1
jax: 0.10.0
libtpu: 0.0.40
codegen_flags: <defaults>
</compile_context>

<pallas_src>
import functools

import jax
import jax.numpy as jnp
from jax.experimental import pallas as pl
from jax.experimental.pallas import tpu as pltpu


_LANE = 128            # TPU lane width (last-dim tiling quantum).
_TM_DEFAULT = 16384    # Flattened columns (lanes) per grid step.
                       #   x tile  = K * TM * 4 B = 256 KiB (f32, K=4)
                       #   o tile  = TM * 4 B     =  64 KiB
                       # Double-buffered this stays well under the default
                       # scoped-VMEM limit on v5e/v6e/v7x while being large
                       # enough to amortize the ~0.35 us per-step overhead.


def _mnl_kernel(w_ref, x_ref, o_ref):
    """o[0, :] = sum_k w[k] * x[k, :]   (pure VPU FMA chain, no MXU).

    w_ref : SMEM (K,)     float32 — linear weight, read as scalars.
    x_ref : VMEM (K, TM)  float32 — lane-dense tile (flattened rows on lanes).
    o_ref : VMEM (1, TM)  float32 — lane-dense output slab.
    """
    k_dim = x_ref.shape[0]
    acc = w_ref[0] * x_ref[0:1, :]
    for k in range(1, k_dim):        # K is tiny & static -> fully unrolled FMAs
        acc = acc + w_ref[k] * x_ref[k:k + 1, :]
    o_ref[...] = acc.astype(o_ref.dtype)


@functools.partial(jax.jit, static_argnames=("tm",))
def multinomial_logit_forward(x, weight, *, tm=_TM_DEFAULT):
    """x: (B, A, K) float32, weight: (1, K) float32 -> (B, A) float32.

    Equivalent to torch: nn.Linear(K, 1, bias=False)(x).squeeze(-1).
    """
    B, A, K = x.shape
    M = B * A

    # Lane-dense layout: big flattened axis -> lanes (XLA does the transpose
    # as a single layout pass in the wrapper; the kernel then streams it).
    x_km = x.reshape(M, K).T                                    # (K, M)

    # Align / pad the flattened axis so every block is full; padded columns
    # compute on zeros and are sliced off below.
    m_aligned = pl.cdiv(M, _LANE) * _LANE
    tm_eff = min(tm, m_aligned)
    m_pad = pl.cdiv(m_aligned, tm_eff) * tm_eff
    if m_pad != M:
        x_km = jnp.pad(x_km, ((0, 0), (0, m_pad - M)))

    w_vec = weight.reshape(K).astype(x.dtype)                   # SMEM scalars

    out = pl.pallas_call(
        _mnl_kernel,
        out_shape=jax.ShapeDtypeStruct((1, m_pad), x.dtype),
        grid=(m_pad // tm_eff,),
        in_specs=[
            # Whole weight vector, untiled, in scalar memory.
            pl.BlockSpec(memory_space=pltpu.MemorySpace.SMEM),
            # Lane-dense x tile: K (full extent, sublanes) x tm_eff lanes.
            pl.BlockSpec((K, tm_eff), lambda i: (0, i)),
        ],
        out_specs=pl.BlockSpec((1, tm_eff), lambda i: (0, i)),
        compiler_params=pltpu.CompilerParams(
            dimension_semantics=("parallel",),
        ),
    )(w_vec, x_km)

    # Drop padding, undo flatten; squeeze(-1) semantics are implicit in the
    # (1, M) output slab.
    return out[0, :M].reshape(B, A)


if __name__ == "__main__":
    num_attributes = 4
    num_alternatives = 8
    batch = 2

    key = jax.random.PRNGKey(0)
    kx, kw = jax.random.split(key)

    # Deterministic synthetic parameters: Linear(num_attributes, 1, bias=False)
    # -> weight shape (1, num_attributes), mimic PyTorch U(-1/sqrt(K), 1/sqrt(K)).
    bound = 1.0 / (num_attributes ** 0.5)
    weight = jax.random.uniform(
        kw, (1, num_attributes), dtype=jnp.float32, minval=-bound, maxval=bound
    )
    x = jax.random.normal(
        kx, (batch, num_alternatives, num_attributes), dtype=jnp.float32
    )

    utilities = multinomial_logit_forward(x, weight)
    utilities = jax.block_until_ready(utilities)

    # Reference check in plain JAX (same semantics as torch Linear + squeeze).
    ref = jnp.einsum("bak,ok->bao", x, weight)[..., 0]
    assert utilities.shape == (batch, num_alternatives)
    assert jnp.allclose(utilities, ref, atol=1e-5, rtol=1e-5)

    print("KERNEL_OK")
</pallas_src>

<mosaic_0001>
module attributes {stable_mosaic.version = 11 : i64} {
  func.func @_mnl_kernel(%arg0: i32, %arg1: memref<4xf32, #tpu.memory_space<smem>>, %arg2: memref<4x128xf32, #tpu.memory_space<vmem>>, %arg3: memref<1x128xf32, #tpu.memory_space<vmem>>) attributes {dimension_semantics = [#tpu.dimension_semantics<parallel>], iteration_bounds = array<i64: 1>, scalar_prefetch = 0 : i64, scratch_operands = 0 : i64, tpu.core_type = #tpu.core_type<tc>, window_params = [{transform_indices = @transform_0, window_bounds = array<i64: 4>}, {transform_indices = @transform_1, window_bounds = array<i64: 4, 128>}, {transform_indices = @transform_2, window_bounds = array<i64: 1, 128>}]} {
    %c0 = arith.constant 0 : index
    %0 = memref.load %arg1[%c0] : memref<4xf32, #tpu.memory_space<smem>>
    %c0_0 = arith.constant 0 : index
    %c0_1 = arith.constant 0 : index
    %1 = vector.load %arg2[%c0_0, %c0_1] : memref<4x128xf32, #tpu.memory_space<vmem>>, vector<1x128xf32>
    %2 = vector.broadcast %0 : f32 to vector<1x128xf32>
    %3 = arith.mulf %2, %1 : vector<1x128xf32>
    %c1 = arith.constant 1 : index
    %4 = memref.load %arg1[%c1] : memref<4xf32, #tpu.memory_space<smem>>
    %c1_2 = arith.constant 1 : index
    %c0_3 = arith.constant 0 : index
    %5 = vector.load %arg2[%c1_2, %c0_3] : memref<4x128xf32, #tpu.memory_space<vmem>>, vector<1x128xf32>
    %6 = vector.broadcast %4 : f32 to vector<1x128xf32>
    %7 = arith.mulf %6, %5 : vector<1x128xf32>
    %8 = arith.addf %3, %7 : vector<1x128xf32>
    %c2 = arith.constant 2 : index
    %9 = memref.load %arg1[%c2] : memref<4xf32, #tpu.memory_space<smem>>
    %c2_4 = arith.constant 2 : index
    %c0_5 = arith.constant 0 : index
    %10 = vector.load %arg2[%c2_4, %c0_5] : memref<4x128xf32, #tpu.memory_space<vmem>>, vector<1x128xf32>
    %11 = vector.broadcast %9 : f32 to vector<1x128xf32>
    %12 = arith.mulf %11, %10 : vector<1x128xf32>
    %13 = arith.addf %8, %12 : vector<1x128xf32>
    %c3 = arith.constant 3 : index
    %14 = memref.load %arg1[%c3] : memref<4xf32, #tpu.memory_space<smem>>
    %c3_6 = arith.constant 3 : index
    %c0_7 = arith.constant 0 : index
    %15 = vector.load %arg2[%c3_6, %c0_7] : memref<4x128xf32, #tpu.memory_space<vmem>>, vector<1x128xf32>
    %16 = vector.broadcast %14 : f32 to vector<1x128xf32>
    %17 = arith.mulf %16, %15 : vector<1x128xf32>
    %18 = arith.addf %13, %17 : vector<1x128xf32>
    %c0_8 = arith.constant 0 : index
    %c0_9 = arith.constant 0 : index
    %19 = vector.load %arg3[%c0_8, %c0_9] : memref<1x128xf32, #tpu.memory_space<vmem>>, vector<1x128xf32>
    tpu.vector_store %arg3[%c0_8, %c0_9], %18 {strides = array<i32>} : memref<1x128xf32, #tpu.memory_space<vmem>>, vector<1x128xf32>,
    return
  }
  func.func @transform_0(%arg0: i32) -> i32 {
    %c0_i32 = arith.constant 0 : i32
    %c0_i32_0 = arith.constant 0 : i32
    return %c0_i32 : i32
  }
  func.func @transform_1(%arg0: i32) -> (i32, i32) {
    %c0_i32 = arith.constant 0 : i32
    %c0_i32_0 = arith.constant 0 : i32
    return %c0_i32, %arg0 : i32, i32
  }
  func.func @transform_2(%arg0: i32) -> (i32, i32) {
    %c0_i32 = arith.constant 0 : i32
    %c0_i32_0 = arith.constant 0 : i32
    return %c0_i32, %arg0 : i32, i32
  }
}

</mosaic_0001>

<llo_original>
// kernel: squeeze.1
$region0: #{squeeze.1}
  %s0 = inlined_call_operand.vmem [shape: f32[16], index: 0, kind: input, shape index: {}]
  %s1 = inlined_call_operand.hbm [shape: f32[2,8], index: 1, kind: output, shape index: {}]
  $region1: #{squeeze.1} parent=0
    #allocation0 [shape = 'u8[1024]{0}', space=vmem, size = 0x400, scoped, tag = 'operand span for operand 1']
    #allocation1 [shape = 's32[1]{0}', space=sflag, size = 0x4, scoped, tag = 'scoped memory for squeeze.1']
    #allocation2 [shape = 'u8[4096]{0}', space=vmem, size = 0x1000, scoped, tag = 'scoped mem for output reshape']
    #allocation3 [shape = 'u8[4096]{0}', space=vmem, size = 0x1000, scoped, tag = 'scoped mem for input reshape']
    %2 = vsyncpa [#allocation1], 0
    %s4 = sshllo.u32 0, 1
    %v5 = vld [vmem:[%s0] sm:%s4]
    %6 = vst [vmem:[#allocation3] sm:%s4] %v5
    %v7 = vld [vmem:[#allocation3] sm:$0x1]
    %vm8 = vcmask 64512
    %9 = vst.msk [vmem:[#allocation2] sm:$0x1] %vm8, %v7
    %v10 = vld [vmem:[#allocation3] sm:$0x1]
    %11 = vrot.lane.b32.xlu0 %v10, 120
    %v12 = vpop.permute.xlu0 %11
    %vm13 = vcmask 64512
    %s14 = scalar_lea.vmem [#allocation2], 1
    %15 = vst.msk [vmem:[%s14] sm:$0x1] %vm13, %v12
    %s17 = sshllo.u32 0, 2
    %v19 = vld [vmem:[#allocation2] sm:%s17]
    %s20 = sshllo.u32 0, 2
    %21 = vst [vmem:[#allocation0] sm:%s20] %v19
    %s23 = ssub.s32 32, 32
    %24 = vsyncadd [#allocation1], %s23
    %s26 = sshll.u32 [#allocation0], 4
    %s27 = int_to_ptr.vmem [resolvable:$true] %s26
    %29 = dma.vmem_to_hbm [thread:$0]  %s27, 32, %s1, [#allocation1]
    %30 = dma.done [#allocation1], 32
    %31 = vsyncpa [#allocation1], 1

// kernel: multinomial_logit_forward.1
$region0: #{multinomial_logit_forward.1}
  #allocation0 [shape = 'u32[]', space=smem, size = 0x4, offset = 0x4, fixed_abs, tag = 'smem constant byte address 0x4 - core index']
  #allocation1 [shape = 'u32[144,128]{1,0:T(1,128)}', space=vmem, size = 0x12000, scoped, tag = 'internal scratch']
  %s0 = inlined_call_operand.vmem [shape: f32[4], index: 0, kind: input, shape index: {}]
  %s1 = inlined_call_operand.vmem [shape: f32[4,128], index: 1, kind: input, shape index: {}]
  %s2 = inlined_call_operand.vmem [shape: f32[1,128], index: 2, kind: output, shape index: {}]
  %s3 = sld [smem:[#allocation0]]
  $region22: #{multinomial_logit_forward.1} parent=0
    _
  %s5 = ssub.s32 1, %s3
  %s6 = scalar_select 0, %s5, %s3
  $region1: #{multinomial_logit_forward.1} parent=0
    #allocation2 [shape = 'u8[512]{0}', space=smem, size = 0x200, scoped, tag = 'input window, operand 0, single buffered']
    #allocation3 [shape = 's32[1]{0}', space=sflag, size = 0x4, scoped, tag = 'scoped memory for multinomial_logit_forward.1']
    %7 = vsyncpa [#allocation3], 0
    // Predicated region
    $region2: #{multinomial_logit_forward.1} parent=1 // pred_check
      _
    $region3: #{multinomial_logit_forward.1} parent=1 // pred_check_branch
      %9 = sbr.rel (0) target = $region5
    $region4: #{multinomial_logit_forward.1} parent=1 // pred_region
      %s11 = ssub.s32 16, 16
      %12 = vsyncadd [#allocation3], %s11
      %s14 = sshll.u32 %s0, 4
      %s15 = int_to_ptr.vmem [resolvable:$true] %s14
      %17 = dma.vmem_to_smem %s15, 16, [#allocation2], [#allocation3]
    $region5: #{multinomial_logit_forward.1} parent=1 // pred_fallthru
      _
    // Predicated region
    $region6: #{multinomial_logit_forward.1} parent=1 // pred_check
      _
    $region7: #{multinomial_logit_forward.1} parent=1 // pred_check_branch
      %19 = sbr.rel (0) target = $region9
    $region8: #{multinomial_logit_forward.1} parent=1 // pred_region
      _
    $region9: #{multinomial_logit_forward.1} parent=1 // pred_fallthru
      _
    // Predicated region
    $region10: #{multinomial_logit_forward.1} parent=1 // pred_check
      _
    $region11: #{multinomial_logit_forward.1} parent=1 // pred_check_branch
      %21 = sbr.rel (0) target = $region13
    $region12: #{multinomial_logit_forward.1} parent=1 // pred_region
      %22 = dma.done [#allocation3], 16
    $region13: #{multinomial_logit_forward.1} parent=1 // pred_fallthru
      _
    %23 = sfence
    %s24 = sld [smem:[#allocation2]]
    %v25 = vld [vmem:[%s1] sm:$0x1]
    %v26 = vstv %s24
    %v27 = vmul.f32 %v26, %v25
    %s28 = sld [smem:[#allocation2 + $0x1]]
    %v29 = vld [vmem:[%s1 + $0x1] sm:$0x1]
    %v30 = vstv %s28
    %v31 = vmul.f32 %v30, %v29
    %v32 = vadd.f32 %v27, %v31
    %s33 = sld [smem:[#allocation2 + $0x2]]
    %v34 = vld [vmem:[%s1 + $0x2] sm:$0x1]
    %v35 = vstv %s33
    %v36 = vmul.f32 %v35, %v34
    %v37 = vadd.f32 %v32, %v36
    %s38 = sld [smem:[#allocation2 + $0x3]]
    %v39 = vld [vmem:[%s1 + $0x3] sm:$0x1]
    %v40 = vstv %s38
    %v41 = vmul.f32 %v40, %v39
    %v42 = vadd.f32 %v37, %v41
    %43 = vst [vmem:[%s2] sm:$0x1] %v42
    // Predicated region
    $region14: #{multinomial_logit_forward.1} parent=1 // pred_check
      _
    $region15: #{multinomial_logit_forward.1} parent=1 // pred_check_branch
      %45 = sbr.rel (0) target = $region17
    $region16: #{multinomial_logit_forward.1} parent=1 // pred_region
      _
    $region17: #{multinomial_logit_forward.1} parent=1 // pred_fallthru
      _
    // Predicated region
    $region18: #{multinomial_logit_forward.1} parent=1 // pred_check
      _
    $region19: #{multinomial_logit_forward.1} parent=1 // pred_check_branch
      %47 = sbr.rel (0) target = $region21
    $region20: #{multinomial_logit_forward.1} parent=1 // pred_region
      _
    $region21: #{multinomial_logit_forward.1} parent=1 // pred_fallthru
      _
    %48 = vsyncpa [#allocation3], 1

</llo_original>
